<compile_context>
chip_gen: v6e
topology: v6e:2x2x1
jax: 0.10.0
libtpu: 0.0.40
codegen_flags: <defaults>
</compile_context>

<pallas_src>
import jax
import jax.numpy as jnp
from jax.experimental import pallas as pl
from jax.experimental.pallas import tpu as pltpu


def _make_cat_mm_kernel(M, P, K, N):
    """Packed layout (rows = M + K, cols = max(P + K, N)):
         packed[:M, :P]        = t2          (M, P)
         packed[:M, P:P+K]     = input3      (M, K)
         packed[M:M+K, :N]     = input4      (K, N)
    """

    def kernel(p_ref, o_ref):
        # Concatenation as two direct slice stores (no cross-lane concat op).
        o_ref[:, :P] = p_ref[:M, :P]

        a = p_ref[:M, P:P + K]          # (M, K)  == input3
        b = p_ref[M:M + K, :N]          # (K, N)  == input4
        if K == 1:
            # Outer product: broadcast multiply on the VPU, MXU stays idle.
            o_ref[:, P:P + N] = a * b
        else:
            # General fallback (not hit by this module's shapes).
            o_ref[:, P:P + N] = jnp.dot(a, b, preferred_element_type=jnp.float32)

    return kernel


def cat_mm(t2, input3, input4):
    M, P = t2.shape
    M2, K = input3.shape
    K2, N = input4.shape
    assert M == M2 and K == K2, "shape mismatch"

    # Pack everything into one tiny f32 slab -> single input DMA.
    cols = max(P + K, N)
    top = jnp.concatenate([t2, input3], axis=1)                 # (M, P+K)
    top = jnp.pad(top, ((0, 0), (0, cols - (P + K))))
    bot = jnp.pad(input4, ((0, 0), (0, cols - N)))              # (K, cols)
    packed = jnp.concatenate([top, bot], axis=0).astype(jnp.float32)

    out_shape = jax.ShapeDtypeStruct((M, P + N), jnp.float32)
    return pl.pallas_call(
        _make_cat_mm_kernel(M, P, K, N),
        out_shape=out_shape,
        in_specs=[pl.BlockSpec(memory_space=pltpu.MemorySpace.VMEM)],
        out_specs=pl.BlockSpec(memory_space=pltpu.MemorySpace.VMEM),
    )(packed)


if __name__ == "__main__":
    key = jax.random.PRNGKey(0)
    k1, k2, k3 = jax.random.split(key, 3)

    # Shapes implied by the module: input3 (2,1), input4 (1,2) -> mm (2,2).
    input3 = jax.random.normal(k1, (2, 1), dtype=jnp.float32)
    input4 = jax.random.normal(k2, (1, 2), dtype=jnp.float32)
    # t2 must have 2 rows to concatenate along dim 1; pick (2, 2).
    t2 = jax.random.normal(k3, (2, 2), dtype=jnp.float32)

    fn = jax.jit(cat_mm)
    out = jax.block_until_ready(fn(t2, input3, input4))

    # Reference check in plain JAX.
    ref = jnp.concatenate([t2, input3 @ input4], axis=1)
    assert out.shape == (2, 4), out.shape
    assert jnp.allclose(out, ref, atol=1e-6, rtol=1e-6), (out, ref)

    print("KERNEL_OK")
</pallas_src>

<mosaic_0001>
module attributes {stable_mosaic.version = 11 : i64} {
  func.func @kernel(%arg0: memref<3x3xf32, #tpu.memory_space<vmem>>, %arg1: memref<2x4xf32, #tpu.memory_space<vmem>>) attributes {dimension_semantics = [], scalar_prefetch = 0 : i64, scratch_operands = 0 : i64, tpu.core_type = #tpu.core_type<tc>} {
    %c0 = arith.constant 0 : index
    %c0_0 = arith.constant 0 : index
    %0 = vector.load %arg0[%c0, %c0_0] : memref<3x3xf32, #tpu.memory_space<vmem>>, vector<2x2xf32>
    %c0_1 = arith.constant 0 : index
    %c0_2 = arith.constant 0 : index
    %1 = vector.load %arg1[%c0_1, %c0_2] : memref<2x4xf32, #tpu.memory_space<vmem>>, vector<2x2xf32>
    tpu.vector_store %arg1[%c0_1, %c0_2], %0 {strides = array<i32>} : memref<2x4xf32, #tpu.memory_space<vmem>>, vector<2x2xf32>,
    %c0_3 = arith.constant 0 : index
    %c2 = arith.constant 2 : index
    %2 = vector.load %arg0[%c0_3, %c2] : memref<3x3xf32, #tpu.memory_space<vmem>>, vector<2x1xf32>
    %c2_4 = arith.constant 2 : index
    %c0_5 = arith.constant 0 : index
    %3 = vector.load %arg0[%c2_4, %c0_5] : memref<3x3xf32, #tpu.memory_space<vmem>>, vector<1x2xf32>
    %4 = vector.broadcast %2 : vector<2x1xf32> to vector<2x2xf32>
    %5 = vector.broadcast %3 : vector<1x2xf32> to vector<2x2xf32>
    %6 = arith.mulf %4, %5 : vector<2x2xf32>
    %c0_6 = arith.constant 0 : index
    %c2_7 = arith.constant 2 : index
    %7 = vector.load %arg1[%c0_6, %c2_7] : memref<2x4xf32, #tpu.memory_space<vmem>>, vector<2x2xf32>
    tpu.vector_store %arg1[%c0_6, %c2_7], %6 {strides = array<i32>} : memref<2x4xf32, #tpu.memory_space<vmem>>, vector<2x2xf32>,
    return
  }
}

</mosaic_0001>

<llo_original>
// kernel: cat_mm.1
$region0: #{cat_mm.1}
  #allocation0 [shape = 'u32[]', space=smem, size = 0x4, offset = 0x4, fixed_abs, tag = 'smem constant byte address 0x4 - core index']
  #allocation1 [shape = 'u32[144,128]{1,0:T(1,128)}', space=vmem, size = 0x12000, scoped, tag = 'internal scratch']
  %s0 = inlined_call_operand.vmem [shape: f32[3,3], index: 0, kind: input, shape index: {}]
  %s1 = inlined_call_operand.hbm [shape: f32[2,4], index: 1, kind: output, shape index: {}]
  %s2 = sld [smem:[#allocation0]]
  $region14: #{cat_mm.1} parent=0
    _
  %s4 = ssub.s32 1, %s2
  %s5 = scalar_select 0, %s4, %s2
  $region1: #{cat_mm.1} parent=0
    #allocation2 [shape = 'u8[1024]{0}', space=vmem, size = 0x400, scoped, tag = 'output window, operand 0, single buffered']
    #allocation3 [shape = 's32[1]{0}', space=sflag, size = 0x4, scoped, tag = 'scoped memory for cat_mm.1']
    %6 = vsyncpa [#allocation3], 0
    // Predicated region
    $region2: #{cat_mm.1} parent=1 // pred_check
      _
    $region3: #{cat_mm.1} parent=1 // pred_check_branch
      %8 = sbr.rel (0) target = $region5
    $region4: #{cat_mm.1} parent=1 // pred_region
      _
    $region5: #{cat_mm.1} parent=1 // pred_fallthru
      _
    %v9 = vld [vmem:[%s0] sm:$0x3]
    %vm10 = vcmask 9216
    %11 = vst.msk [vmem:[#allocation2] sm:$0x3] %vm10, %v9
    %v12 = vld [vmem:[%s0] sm:$0x3]
    %v13 = vld [vmem:[%s0 + $0x2] sm:$0x1]
    %15 = vset.pattern.permute.xlu0 2
    %16 = vperm.xlu0 %15, %v12
    %v17 = vpop.permute.xlu0 %16
    %v19 = vlaneseq
    %v20 = vshrl.u32 %v19, 7
    %v21 = vsub.s32 0, %v20
    %v22 = vrot.slane %v13, %v21
    %v23 = vmul.f32 %v17, %v22
    %25 = vrot.lane.b32.xlu0 %v23, 2
    %v26 = vpop.permute.xlu0 %25
    %vm28 = vcmask 25616
    %29 = vst.msk [vmem:[#allocation2] sm:$0x3] %vm28, %v26
    // Predicated region
    $region6: #{cat_mm.1} parent=1 // pred_check
      _
    $region7: #{cat_mm.1} parent=1 // pred_check_branch
      %31 = sbr.rel (0) target = $region9
    $region8: #{cat_mm.1} parent=1 // pred_region
      %s33 = ssub.s32 32, 32
      %34 = vsyncadd [#allocation3], %s33
      %s36 = sshll.u32 [#allocation2], 4
      %s37 = int_to_ptr.vmem [resolvable:$true] %s36
      %39 = dma.vmem_to_hbm [thread:$0]  %s37, 32, %s1, [#allocation3]
    $region9: #{cat_mm.1} parent=1 // pred_fallthru
      _
    // Predicated region
    $region10: #{cat_mm.1} parent=1 // pred_check
      _
    $region11: #{cat_mm.1} parent=1 // pred_check_branch
      %41 = sbr.rel (0) target = $region13
    $region12: #{cat_mm.1} parent=1 // pred_region
      %42 = dma.done [#allocation3], 32
    $region13: #{cat_mm.1} parent=1 // pred_fallthru
      _
    %43 = vsyncpa [#allocation3], 1

</llo_original>
